<compile_context>
chip_gen: v5e
topology: v5e:2x2
jax: 0.10.0
libtpu: 0.0.40
codegen_flags: <defaults>
</compile_context>

<pallas_src>
import functools

import jax
import jax.numpy as jnp
from jax.experimental import pallas as pl
from jax.experimental.pallas import tpu as pltpu


def _round_up(x, m):
    return ((x + m - 1) // m) * m


def _focal_kernel(alpha_ref, logits_ref, labels_ref, out_ref,
                  *, gamma, num_valid, tm, steps):
    p = pl.program_id(0)          # partial index (parallel axis)
    j = pl.program_id(1)          # reduction step within partial

    @pl.when(j == 0)
    def _():
        out_ref[...] = jnp.zeros_like(out_ref)

    logits = logits_ref[...].astype(jnp.float32)          # (C, tm) — cast in-kernel (bf16 over DMA)
    labels = labels_ref[...]                              # (1, tm) int32
    C, TM = logits.shape

    # Numerically-stable log-softmax over the class (sublane) axis.
    m = jnp.max(logits, axis=0, keepdims=True)            # (1, tm)
    shifted = logits - m
    lse = jnp.log(jnp.sum(jnp.exp(shifted), axis=0, keepdims=True))   # (1, tm)

    # Select the true-class entries via a predicate (no float one-hot, no gather).
    cls = jax.lax.broadcasted_iota(jnp.int32, (C, TM), 0)
    is_t = cls == labels                                   # (C, tm)
    logp_t = jnp.sum(jnp.where(is_t, shifted, 0.0), axis=0, keepdims=True) - lse   # (1, tm)
    p_t = jnp.exp(logp_t)

    alpha = alpha_ref[...].astype(jnp.float32)             # (C, 1)
    alpha_t = jnp.sum(jnp.where(is_t, alpha, 0.0), axis=0, keepdims=True)          # (1, tm)

    one_m_p = 1.0 - p_t
    g = float(gamma)
    if g == int(g) and 0 <= int(g) <= 8:
        # integer gamma -> repeated multiplies on the VPU (no exp/log on the EUP)
        pow_term = one_m_p ** int(g)
    else:
        pow_term = jnp.power(one_m_p, jnp.float32(g))

    loss = -alpha_t * pow_term * logp_t                    # (1, tm)

    # Mask out padded columns (rows beyond the real M).
    col = jax.lax.broadcasted_iota(jnp.int32, (1, TM), 1) + (p * steps + j) * tm
    loss = jnp.where(col < num_valid, loss, 0.0)

    # Accumulate per-column loss in the resident output block (sublane row 0).
    out_ref[0:1, :] += loss


def focal_loss_pallas(logits, labels, alpha, gamma=2.0, size_average=True,
                      tm=2048, num_partials=2):
    """logits: [B, N, C] or [B, C] (any float dtype); labels: [B, N] or [B]; alpha: [C]."""
    C = logits.shape[-1]
    logits2d = logits.reshape(-1, C)                 # keep native dtype (bf16 stays bf16 in HBM)
    labels1d = labels.reshape(-1).astype(jnp.int32)
    M = logits2d.shape[0]

    # Row tile rides the lane axis; cap it so a (C, tm) f32 working tile stays modest.
    c_pad = max(C, 8)
    tm_cap = max(128, (2 * 1024 * 1024 // (c_pad * 4)) // 128 * 128)
    tm = max(128, min(tm, tm_cap, _round_up(M, 128)))

    n_tiles = -(-M // tm)
    P = max(1, min(num_partials, n_tiles))           # per-core partial sums (v7x: 2 TCs)
    steps = -(-n_tiles // P)                         # reduction steps per partial
    Mp = P * steps * tm
    pad = Mp - M

    logits_t = logits2d.T                            # (C, M): classes on sublanes, rows on lanes
    if pad:
        logits_t = jnp.pad(logits_t, ((0, 0), (0, pad)))
        labels1d = jnp.pad(labels1d, (0, pad))
    labels2d = labels1d.reshape(1, Mp)
    alpha2d = alpha.reshape(C, 1).astype(jnp.float32)

    kernel = functools.partial(_focal_kernel, gamma=float(gamma),
                               num_valid=M, tm=tm, steps=steps)

    tile_bytes = c_pad * tm * 4
    vmem_limit = min(48 * 1024 * 1024, max(32 * 1024 * 1024, 8 * tile_bytes))

    partials = pl.pallas_call(
        kernel,
        # (P*8, tm) keeps the output block a clean (8, tm) tile; extra rows stay zero.
        out_shape=jax.ShapeDtypeStruct((P * 8, tm), jnp.float32),
        grid_spec=pltpu.PrefetchScalarGridSpec(
            num_scalar_prefetch=0,
            grid=(P, steps),
            in_specs=[
                pl.BlockSpec((C, 1), lambda p, j: (0, 0)),                # alpha (resident)
                pl.BlockSpec((C, tm), lambda p, j: (0, p * steps + j)),   # logits^T tile
                pl.BlockSpec((1, tm), lambda p, j: (0, p * steps + j)),   # labels tile
            ],
            out_specs=pl.BlockSpec((8, tm), lambda p, j: (p, 0)),         # per-partial accumulator
        ),
        compiler_params=pltpu.CompilerParams(
            dimension_semantics=("parallel", "arbitrary"),
            vmem_limit_bytes=vmem_limit),
    )(alpha2d, logits_t, labels2d)

    total = jnp.sum(partials)
    return total / jnp.float32(M) if size_average else total


def build_alpha(alpha, num_classes):
    """Replicates Focal_Loss.__init__ alpha handling (None / list / scalar)."""
    if alpha is None:
        return jnp.ones((num_classes,), jnp.float32)
    if isinstance(alpha, (list, tuple)):
        assert len(alpha) == num_classes
        return jnp.asarray(alpha, jnp.float32)
    assert alpha < 1
    return jnp.concatenate([
        jnp.full((1,), alpha, jnp.float32),
        jnp.full((num_classes - 1,), 1.0 - alpha, jnp.float32),
    ])


def _focal_loss_ref(logits, labels, alpha, gamma=2.0, size_average=True):
    C = logits.shape[-1]
    logits2d = logits.reshape(-1, C).astype(jnp.float32)
    labels1d = labels.reshape(-1)
    logp = jax.nn.log_softmax(logits2d, axis=-1)
    logp_t = jnp.take_along_axis(logp, labels1d[:, None], axis=1)[:, 0]
    p_t = jnp.exp(logp_t)
    a_t = alpha[labels1d]
    loss = -a_t * jnp.power(1.0 - p_t, gamma) * logp_t
    return jnp.mean(loss) if size_average else jnp.sum(loss)


if __name__ == "__main__":
    num_classes = 3
    gamma = 2.0
    key = jax.random.PRNGKey(0)
    k1, k2, k3, k4 = jax.random.split(key, 4)

    # Test 1: [B, N, C] f32, alpha=None (ones), mean reduction — single tile.
    B, N = 2, 8
    logits = jax.random.normal(k1, (B, N, num_classes), dtype=jnp.float32)
    labels = jax.random.randint(k2, (B, N), 0, num_classes, dtype=jnp.int32)
    alpha = build_alpha(None, num_classes)
    out = focal_loss_pallas(logits, labels, alpha, gamma=gamma, size_average=True)
    out = jax.block_until_ready(out)
    ref = _focal_loss_ref(logits, labels, alpha, gamma=gamma, size_average=True)
    assert jnp.allclose(out, ref, rtol=1e-5, atol=1e-6), (out, ref)

    # Test 2: bigger M, bf16 logits, scalar alpha, sum reduction — exercises
    # multi-step reduction, padding mask and the two-partial parallel axis.
    B2, N2 = 4, 500
    logits2 = jax.random.normal(k3, (B2, N2, num_classes),
                                dtype=jnp.float32).astype(jnp.bfloat16)
    labels2 = jax.random.randint(k4, (B2, N2), 0, num_classes, dtype=jnp.int32)
    alpha2 = build_alpha(0.25, num_classes)
    out2 = focal_loss_pallas(logits2, labels2, alpha2, gamma=gamma,
                             size_average=False, tm=256)
    out2 = jax.block_until_ready(out2)
    ref2 = _focal_loss_ref(logits2.astype(jnp.float32), labels2, alpha2,
                           gamma=gamma, size_average=False)
    assert jnp.allclose(out2, ref2, rtol=1e-4, atol=1e-4), (out2, ref2)

    # TODO(synk): the __init__-time print of alpha/gamma from the PyTorch module is omitted.
    print("KERNEL_OK")
</pallas_src>

<mosaic_0001>
module attributes {stable_mosaic.version = 11 : i64} {
  func.func @_focal_kernel(%arg0: i32, %arg1: i32, %arg2: memref<3x1xf32, #tpu.memory_space<vmem>>, %arg3: memref<3x128xf32, #tpu.memory_space<vmem>>, %arg4: memref<1x128xi32, #tpu.memory_space<vmem>>, %arg5: memref<8x128xf32, #tpu.memory_space<vmem>>) attributes {dimension_semantics = [#tpu.dimension_semantics<parallel>, #tpu.dimension_semantics<arbitrary>], iteration_bounds = array<i64: 1, 1>, scalar_prefetch = 0 : i64, scratch_operands = 0 : i64, tpu.core_type = #tpu.core_type<tc>, window_params = [{pipeline_mode = #tpu.pipeline_mode<synchronous>, transform_indices = @transform_0, window_bounds = array<i64: 3, 1>}, {transform_indices = @transform_1, window_bounds = array<i64: 3, 128>}, {transform_indices = @transform_2, window_bounds = array<i64: 1, 128>}, {transform_indices = @transform_3, window_bounds = array<i64: 8, 128>}]} {
    %c0_i32 = arith.constant 0 : i32
    %0 = arith.cmpi eq, %arg1, %c0_i32 : i32
    %1 = arith.extui %0 : i1 to i32
    %c0_i32_0 = arith.constant 0 : i32
    %2 = arith.cmpi ne, %1, %c0_i32_0 : i32
    scf.if %2 {
      %cst_18 = arith.constant 0.000000e+00 : f32
      %49 = vector.broadcast %cst_18 : f32 to vector<8x128xf32>
      %c0_19 = arith.constant 0 : index
      %c0_20 = arith.constant 0 : index
      %50 = vector.load %arg5[%c0_19, %c0_20] : memref<8x128xf32, #tpu.memory_space<vmem>>, vector<8x128xf32>
      tpu.vector_store %arg5[%c0_19, %c0_20], %49 {strides = array<i32>} : memref<8x128xf32, #tpu.memory_space<vmem>>, vector<8x128xf32>,
    } else {
    }
    %c0 = arith.constant 0 : index
    %c0_1 = arith.constant 0 : index
    %3 = vector.load %arg3[%c0, %c0_1] : memref<3x128xf32, #tpu.memory_space<vmem>>, vector<3x128xf32>
    %c0_2 = arith.constant 0 : index
    %c0_3 = arith.constant 0 : index
    %4 = vector.load %arg4[%c0_2, %c0_3] : memref<1x128xi32, #tpu.memory_space<vmem>>, vector<1x128xi32>
    %cst = arith.constant dense<0xFF800000> : vector<128xf32>
    %5 = vector.multi_reduction <maximumf>, %3, %cst [0] : vector<3x128xf32> to vector<128xf32>
    %6 = vector.shape_cast %5 : vector<128xf32> to vector<1x128xf32>
    %7 = vector.broadcast %6 : vector<1x128xf32> to vector<3x128xf32>
    %8 = arith.subf %3, %7 : vector<3x128xf32>
    %9 = math.exp %8 : vector<3x128xf32>
    %cst_4 = arith.constant dense<0.000000e+00> : vector<128xf32>
    %10 = vector.multi_reduction <add>, %9, %cst_4 [0] : vector<3x128xf32> to vector<128xf32>
    %11 = vector.shape_cast %10 : vector<128xf32> to vector<1x128xf32>
    %12 = math.log %11 : vector<1x128xf32>
    %13 = tpu.iota {dimensions = array<i32: 0>} : vector<3x128xi32>
    %14 = vector.broadcast %4 : vector<1x128xi32> to vector<3x128xi32>
    %15 = arith.cmpi eq, %13, %14 : vector<3x128xi32>
    %cst_5 = arith.constant 0.000000e+00 : f32
    %16 = vector.broadcast %cst_5 : f32 to vector<3x128xf32>
    %17 = arith.select %15, %8, %16 : vector<3x128xi1>, vector<3x128xf32>
    %cst_6 = arith.constant dense<0.000000e+00> : vector<128xf32>
    %18 = vector.multi_reduction <add>, %17, %cst_6 [0] : vector<3x128xf32> to vector<128xf32>
    %19 = vector.shape_cast %18 : vector<128xf32> to vector<1x128xf32>
    %20 = arith.subf %19, %12 : vector<1x128xf32>
    %21 = math.exp %20 : vector<1x128xf32>
    %c0_7 = arith.constant 0 : index
    %c0_8 = arith.constant 0 : index
    %22 = vector.load %arg2[%c0_7, %c0_8] : memref<3x1xf32, #tpu.memory_space<vmem>>, vector<3x1xf32>
    %cst_9 = arith.constant 0.000000e+00 : f32
    %23 = vector.shape_cast %22 : vector<3x1xf32> to vector<3x1xf32>
    %24 = vector.broadcast %23 : vector<3x1xf32> to vector<3x128xf32>
    %25 = vector.broadcast %cst_9 : f32 to vector<3x128xf32>
    %26 = arith.select %15, %24, %25 : vector<3x128xi1>, vector<3x128xf32>
    %cst_10 = arith.constant dense<0.000000e+00> : vector<128xf32>
    %27 = vector.multi_reduction <add>, %26, %cst_10 [0] : vector<3x128xf32> to vector<128xf32>
    %28 = vector.shape_cast %27 : vector<128xf32> to vector<1x128xf32>
    %cst_11 = arith.constant 1.000000e+00 : f32
    %29 = vector.broadcast %cst_11 : f32 to vector<1x128xf32>
    %30 = arith.subf %29, %21 : vector<1x128xf32>
    %31 = arith.mulf %30, %30 : vector<1x128xf32>
    %cst_12 = arith.constant 0.000000e+00 : f32
    %32 = vector.broadcast %cst_12 : f32 to vector<1x128xf32>
    %33 = arith.subf %32, %28 : vector<1x128xf32>
    %34 = arith.mulf %33, %31 : vector<1x128xf32>
    %35 = arith.mulf %34, %20 : vector<1x128xf32>
    %36 = tpu.iota {dimensions = array<i32: 1>} : vector<1x128xi32>
    %c1_i32 = arith.constant 1 : i32
    %37 = arith.muli %arg0, %c1_i32 : i32
    %38 = arith.addi %37, %arg1 : i32
    %c128_i32 = arith.constant 128 : i32
    %39 = arith.muli %38, %c128_i32 : i32
    %40 = vector.broadcast %39 : i32 to vector<1x128xi32>
    %41 = arith.addi %36, %40 : vector<1x128xi32>
    %c16_i32 = arith.constant 16 : i32
    %42 = vector.broadcast %c16_i32 : i32 to vector<1x128xi32>
    %43 = arith.cmpi slt, %41, %42 : vector<1x128xi32>
    %cst_13 = arith.constant 0.000000e+00 : f32
    %44 = vector.broadcast %cst_13 : f32 to vector<1x128xf32>
    %45 = arith.select %43, %35, %44 : vector<1x128xi1>, vector<1x128xf32>
    %c0_14 = arith.constant 0 : index
    %c0_15 = arith.constant 0 : index
    %46 = vector.load %arg5[%c0_14, %c0_15] : memref<8x128xf32, #tpu.memory_space<vmem>>, vector<1x128xf32>
    %47 = arith.addf %46, %45 : vector<1x128xf32>
    %c0_16 = arith.constant 0 : index
    %c0_17 = arith.constant 0 : index
    %48 = vector.load %arg5[%c0_16, %c0_17] : memref<8x128xf32, #tpu.memory_space<vmem>>, vector<1x128xf32>
    tpu.vector_store %arg5[%c0_16, %c0_17], %47 {strides = array<i32>} : memref<8x128xf32, #tpu.memory_space<vmem>>, vector<1x128xf32>,
    return
  }
  func.func @transform_0(%arg0: i32, %arg1: i32) -> (i32, i32) {
    %c0_i32 = arith.constant 0 : i32
    %c0_i32_0 = arith.constant 0 : i32
    %c0_i32_1 = arith.constant 0 : i32
    return %c0_i32, %c0_i32_0 : i32, i32
  }
  func.func @transform_1(%arg0: i32, %arg1: i32) -> (i32, i32) {
    %c1_i32 = arith.constant 1 : i32
    %0 = arith.muli %arg0, %c1_i32 : i32
    %1 = arith.addi %0, %arg1 : i32
    %c0_i32 = arith.constant 0 : i32
    %c0_i32_0 = arith.constant 0 : i32
    return %c0_i32, %1 : i32, i32
  }
  func.func @transform_2(%arg0: i32, %arg1: i32) -> (i32, i32) {
    %c1_i32 = arith.constant 1 : i32
    %0 = arith.muli %arg0, %c1_i32 : i32
    %1 = arith.addi %0, %arg1 : i32
    %c0_i32 = arith.constant 0 : i32
    %c0_i32_0 = arith.constant 0 : i32
    return %c0_i32, %1 : i32, i32
  }
  func.func @transform_3(%arg0: i32, %arg1: i32) -> (i32, i32) {
    %c0_i32 = arith.constant 0 : i32
    %c0_i32_0 = arith.constant 0 : i32
    return %arg0, %c0_i32 : i32, i32
  }
}

</mosaic_0001>

<llo_original>
// kernel: tpu_custom_call.1
$region0: #{tpu_custom_call.1}
  #allocation0 [shape = 'u32[]', space=smem, size = 0x4, offset = 0x4, fixed_abs, tag = 'smem constant byte address 0x4 - core index']
  #allocation1 [shape = 'u32[72,128]{1,0:T(1,128)}', space=vmem, size = 0x9000, scoped, tag = 'internal scratch']
  %s0 = inlined_call_operand.vmem [shape: f32[3,1], index: 0, kind: input, shape index: {}]
  %s1 = inlined_call_operand.vmem [shape: f32[3,128], index: 1, kind: input, shape index: {}]
  %s2 = inlined_call_operand.vmem [shape: s32[1,128], index: 2, kind: input, shape index: {}]
  %s3 = inlined_call_operand.hbm [shape: f32[8,128], index: 3, kind: output, shape index: {}]
  %s4 = sld [smem:[#allocation0]]
  $region26: #{tpu_custom_call.1} parent=0
    _
  %s6 = ssub.s32 1, %s4
  %s7 = scalar_select 0, %s6, %s4
  $region1: #{tpu_custom_call.1} parent=0
    #allocation2 [shape = 'u8[4096]{0}', space=vmem, size = 0x1000, scoped, tag = 'output window, operand 0, single buffered']
    #allocation3 [shape = 's32[1]{0}', space=sflag, size = 0x4, scoped, tag = 'scoped memory for tpu_custom_call.1']
    %8 = vsyncpa [#allocation3], 0
    // Predicated region
    $region2: #{tpu_custom_call.1} parent=1 // pred_check
      _
    $region3: #{tpu_custom_call.1} parent=1 // pred_check_branch
      %10 = sbr.rel (0) target = $region5
    $region4: #{tpu_custom_call.1} parent=1 // pred_region
      _
    $region5: #{tpu_custom_call.1} parent=1 // pred_fallthru
      _
    // Predicated region
    $region6: #{tpu_custom_call.1} parent=1 // pred_check
      _
    $region7: #{tpu_custom_call.1} parent=1 // pred_check_branch
      %12 = sbr.rel (0) target = $region9
    $region8: #{tpu_custom_call.1} parent=1 // pred_region
      %s13 = sadd.s32 0, 0
      %p14 = scmp.lt.s32.totalorder %s13, 0
      %s15 = scalar_select %p14, %s13, 0
      %s16 = smul.addr %s15, 4
      %s17 = scalar_lea.vmem %s1, %s16
      %s18 = sadd.s32 0, 0
    $region9: #{tpu_custom_call.1} parent=1 // pred_fallthru
      _
    // Predicated region
    $region10: #{tpu_custom_call.1} parent=1 // pred_check
      _
    $region11: #{tpu_custom_call.1} parent=1 // pred_check_branch
      %20 = sbr.rel (0) target = $region13
    $region12: #{tpu_custom_call.1} parent=1 // pred_region
      %s21 = sadd.s32 0, 0
      %p22 = scmp.lt.s32.totalorder %s21, 0
      %s23 = scalar_select %p22, %s21, 0
      %s24 = scalar_lea.vmem %s2, %s23
      %s25 = sadd.s32 0, 0
    $region13: #{tpu_custom_call.1} parent=1 // pred_fallthru
      _
    %s26 = sadd.s32 0, 0
    %p27 = scmp.lt.s32.totalorder %s26, 0
    %s28 = scalar_select %p27, %s26, 0
    %s29 = smul.addr %s28, 4
    %s30 = scalar_lea.vmem %s1, %s29
    %s31 = sadd.s32 0, 0
    %p32 = scmp.lt.s32.totalorder %s31, 0
    %s33 = scalar_select %p32, %s31, 0
    %s34 = scalar_lea.vmem %s2, %s33
    %s35 = sadd.s32 0, 0
    %p36 = scmp.lt.s32.totalorder %s35, 0
    %s37 = scalar_select %p36, %s35, 0
    %s38 = smul.addr %s37, 4
    %s39 = scalar_lea.vmem %s1, %s38
    %s40 = sadd.s32 0, 0
    %s41 = sadd.s32 0, 0
    %p42 = scmp.lt.s32.totalorder %s41, 0
    %s43 = scalar_select %p42, %s41, 0
    %s44 = scalar_lea.vmem %s2, %s43
    %s45 = sadd.s32 0, 0
    %p46 = scmp.eq.s32.totalorder 0, 0
    // Predicated region
    $region14: #{tpu_custom_call.1} parent=1 // pred_check
      %p47 = pneg %p46
    $region15: #{tpu_custom_call.1} parent=1 // pred_check_branch
      %49 = sbr.rel (%p47) target = $region17
    $region16: #{tpu_custom_call.1} parent=1 // pred_region
      %50 = vst [vmem:[#allocation2] sm:$0xff] 0.0
    $region17: #{tpu_custom_call.1} parent=1 // pred_fallthru
      _
    %v51 = vld [vmem:[%s39] sm:$0x7]
    %v52 = vld [vmem:[%s44] sm:$0x1]
    %vm53 = vcmask 1042432
    %v54 = vsel %vm53, %v51, -inf
    %v55 = vrot.slane %v54, 4
    %v56 = vmax.f32 %v54, %v55
    %v57 = vrot.slane %v56, 2
    %v58 = vmax.f32 %v56, %v57
    %v59 = vrot.slane %v58, 1
    %v60 = vmax.f32 %v58, %v59
    %v61 = vsub.f32 %v51, %v60
    %v62 = vmul.f32 %v61, 1.442695
    %v63 = vpow.pop %v62
    %v64 = vsel %vm53, %v63, 0.0
    %v65 = vrot.slane %v64, 4
    %v66 = vadd.f32 %v64, %v65
    %v67 = vrot.slane %v66, 2
    %v68 = vadd.f32 %v66, %v67
    %v69 = vrot.slane %v68, 1
    %v70 = vadd.f32 %v68, %v69
    %v71 = vlog2.pop %v70
    %v72 = vmul.f32 %v71, 0.6931472
    %v73 = vlaneseq
    %v74 = vshrl.u32 %v73, 7
    %v75 = vperm.slane %v52, 0
    %vm76 = vcmp.eq.s32.totalorder %v74, %v75
    %v77 = vsel %vm76, %v61, 0.0
    %v78 = vsel %vm53, %v77, 0.0
    %v79 = vrot.slane %v78, 4
    %v80 = vadd.f32 %v78, %v79
    %v81 = vrot.slane %v80, 2
    %v82 = vadd.f32 %v80, %v81
    %v83 = vrot.slane %v82, 1
    %v84 = vadd.f32 %v82, %v83
    %v85 = vsub.f32 %v84, %v72
    %v86 = vmul.f32 %v85, 1.442695
    %v87 = vpow.pop %v86
    %v88 = vld [vmem:[%s0] sm:$0x7]
    %90 = vset.pattern.permute.xlu0 0
    %91 = vperm.xlu0 %90, %v88
    %v92 = vpop.permute.xlu0 %91
    %v94 = vsel %vm76, %v92, 0.0
    %v95 = vsel %vm53, %v94, 0.0
    %v96 = vrot.slane %v95, 4
    %v97 = vadd.f32 %v95, %v96
    %v98 = vrot.slane %v97, 2
    %v99 = vadd.f32 %v97, %v98
    %v100 = vrot.slane %v99, 1
    %v101 = vadd.f32 %v99, %v100
    %v102 = vsub.f32 1.0, %v87
    %v103 = vmul.f32 %v102, %v102
    %v104 = vsub.f32 0.0, %v101
    %v105 = vmul.f32 %v104, %v103
    %v106 = vmul.f32 %v105, %v85
    %v107 = vlaneseq
    %v108 = vand.u32 %v107, 127
    %s109 = sadd.s32 0, 0
    %s110 = smul.u32 %s109, 128
    %v111 = vstv %s110
    %v112 = vadd.s32 %v108, %v111
    %vm113 = vcmp.lt.s32.totalorder %v112, 16
    %v114 = vsel %vm113, %v106, 0.0
    %v115 = vld [vmem:[#allocation2] sm:$0x1]
    %v116 = vadd.f32 %v115, %v114
    %117 = vst [vmem:[#allocation2] sm:$0x1] %v116
    // Predicated region
    $region18: #{tpu_custom_call.1} parent=1 // pred_check
      _
    $region19: #{tpu_custom_call.1} parent=1 // pred_check_branch
      %119 = sbr.rel (0) target = $region21
    $region20: #{tpu_custom_call.1} parent=1 // pred_region
      %121 = vsyncadd [#allocation3], 0
      %s123 = sshll.u32 [#allocation2], 4
      %s124 = int_to_ptr.vmem [resolvable:$true] %s123
      %s125 = sshll.u32 %s3, 4
      %s126 = int_to_ptr.hbm [resolvable:$true] %s125
      %128 = dma.vmem_to_hbm [thread:$0]  %s124, 128, %s126, [#allocation3]
    $region21: #{tpu_custom_call.1} parent=1 // pred_fallthru
      _
    // Predicated region
    $region22: #{tpu_custom_call.1} parent=1 // pred_check
      _
    $region23: #{tpu_custom_call.1} parent=1 // pred_check_branch
      %130 = sbr.rel (0) target = $region25
    $region24: #{tpu_custom_call.1} parent=1 // pred_region
      %132 = dma.done [#allocation3], 128
    $region25: #{tpu_custom_call.1} parent=1 // pred_fallthru
      _
    %133 = vsyncpa [#allocation3], 1

</llo_original>
